<compile_context>
chip_gen: v5e
topology: v5e:2x2
jax: 0.10.0
libtpu: 0.0.40
codegen_flags: <defaults>
</compile_context>

<pallas_src>
import math

import jax
import jax.numpy as jnp
from jax.experimental import pallas as pl
from jax.experimental.pallas import tpu as pltpu

_NEG_BIG = -1e30  # finite "-inf" for padded vocab columns (exp -> 0, no NaNs)


def _round_up(x, m):
    return (x + m - 1) // m * m


def _proj_logsoftmax_single_kernel(x_ref, w_ref, b_ref, o_ref):
    # Whole vocab in one lane tile: matmul once, direct log-softmax.
    z = jnp.dot(x_ref[...], w_ref[...], preferred_element_type=jnp.float32)
    z = z + b_ref[...].astype(jnp.float32)
    m = jnp.max(z, axis=-1, keepdims=True)
    lse = m + jnp.log(jnp.sum(jnp.exp(z - m), axis=-1, keepdims=True))
    o_ref[...] = (z - lse).astype(o_ref.dtype)


def _proj_logsoftmax_twopass_kernel(x_ref, w_ref, b_ref, o_ref, m_sc, l_sc):
    p = pl.program_id(1)  # 0 = online max/sum-exp pass, 1 = write pass
    j = pl.program_id(2)  # vocab tile

    # (TM, D) @ (D, TN) -> (TM, TN) on the MXU, f32 accumulation.
    z = jnp.dot(x_ref[...], w_ref[...], preferred_element_type=jnp.float32)
    z = z + b_ref[...].astype(jnp.float32)

    @pl.when(p == 0)
    def _():
        @pl.when(j == 0)
        def _():
            m_sc[...] = jnp.full_like(m_sc, -jnp.inf)
            l_sc[...] = jnp.zeros_like(l_sc)

        m_prev = m_sc[...]
        m_new = jnp.maximum(m_prev, jnp.max(z, axis=-1, keepdims=True))
        l_sc[...] = (l_sc[...] * jnp.exp(m_prev - m_new)
                     + jnp.sum(jnp.exp(z - m_new), axis=-1, keepdims=True))
        m_sc[...] = m_new

    @pl.when(p == 1)
    def _():
        lse = m_sc[...] + jnp.log(l_sc[...])
        o_ref[...] = (z - lse).astype(o_ref.dtype)


def proj_layer(x, w, b, *, tile_m=256, tile_n=512, mxu_dtype=None):
    """log_softmax(x @ w + b, axis=-1).

    x: (..., d_model); w: (d_model, vocab) (nn.Linear weight, transposed);
    b: (vocab,).  `mxu_dtype` (e.g. jnp.bfloat16 on v6e/v7x) casts only the
    matmul operands; accumulation and the log-softmax stay in f32.
    """
    orig_shape = x.shape
    d_model = orig_shape[-1]
    vocab = w.shape[-1]
    out_dtype = x.dtype

    x2 = x.reshape(-1, d_model)
    M = x2.shape[0]

    if mxu_dtype is not None:
        x2 = x2.astype(mxu_dtype)
        w = w.astype(mxu_dtype)

    x_isz = jnp.dtype(x2.dtype).itemsize
    w_isz = jnp.dtype(w.dtype).itemsize
    o_isz = jnp.dtype(out_dtype).itemsize

    # Sublane packing multiple for the activation dtype (8 f32, 16 bf16, ...).
    sub = max(8, 32 // x_isz)

    # MXU-aligned tiles, clamped to the (padded) problem size.
    tm = min(tile_m, _round_up(M, sub))
    v128 = _round_up(vocab, 128)

    # Single-pass path: whole vocab fits in one lane tile & comfortably in VMEM.
    single_vmem = 2 * (tm * d_model * x_isz + d_model * v128 * w_isz
                       + v128 * 4 + tm * v128 * o_isz)
    single_pass = (v128 <= tile_n) and (single_vmem <= 48 * 1024 * 1024)

    tn = v128 if single_pass else min(tile_n, v128)

    M_pad = _round_up(M, tm)
    V_pad = _round_up(vocab, tn)

    # Pad only when actually needed (common case after clamping: no pad).
    if M_pad != M:
        x2 = jnp.pad(x2, ((0, M_pad - M), (0, 0)))
    if V_pad != vocab:
        w = jnp.pad(w, ((0, 0), (0, V_pad - vocab)))
        b = jnp.pad(b, (0, V_pad - vocab), constant_values=_NEG_BIG)
    b2 = b.reshape(1, V_pad).astype(jnp.float32)

    n_row_tiles = M_pad // tm
    n_vocab_tiles = V_pad // tn

    # Double-buffered working-set estimate -> VMEM limit with headroom
    # (capped at 64 MiB so the same tiles stay safe on v7x).
    vmem_need = 2 * (tm * d_model * x_isz + d_model * tn * w_isz
                     + tn * 4 + tm * tn * o_isz) + 2 * tm * 4
    vmem_limit = int(min(max(2 * vmem_need, 32 * 1024 * 1024),
                         64 * 1024 * 1024))

    if single_pass:
        grid = (n_row_tiles,)
        flops = 2 * M_pad * d_model * V_pad
        transcendentals = M_pad * V_pad
        bytes_accessed = (x2.size * x_isz + w.size * w_isz + b2.size * 4
                          + M_pad * V_pad * o_isz)
        out = pl.pallas_call(
            _proj_logsoftmax_single_kernel,
            out_shape=jax.ShapeDtypeStruct((M_pad, V_pad), out_dtype),
            grid_spec=pltpu.PrefetchScalarGridSpec(
                num_scalar_prefetch=0,
                grid=grid,
                in_specs=[
                    pl.BlockSpec((tm, d_model), lambda i: (i, 0)),   # x rows
                    pl.BlockSpec((d_model, V_pad), lambda i: (0, 0)),  # full W
                    pl.BlockSpec((1, V_pad), lambda i: (0, 0)),        # bias
                ],
                out_specs=pl.BlockSpec((tm, V_pad), lambda i: (i, 0)),
            ),
            compiler_params=pltpu.CompilerParams(
                dimension_semantics=("parallel",),
                vmem_limit_bytes=vmem_limit),
            cost_estimate=pl.CostEstimate(flops=flops,
                                          transcendentals=transcendentals,
                                          bytes_accessed=bytes_accessed),
        )(x2, w, b2)
    else:
        grid = (n_row_tiles, 2, n_vocab_tiles)
        # Two matmul passes: weights are streamed twice per row tile.
        flops = 2 * 2 * M_pad * d_model * V_pad
        transcendentals = 2 * M_pad * V_pad
        bytes_accessed = (x2.size * x_isz
                          + 2 * n_row_tiles * w.size * w_isz
                          + 2 * n_row_tiles * b2.size * 4
                          + M_pad * V_pad * o_isz)
        out = pl.pallas_call(
            _proj_logsoftmax_twopass_kernel,
            out_shape=jax.ShapeDtypeStruct((M_pad, V_pad), out_dtype),
            grid_spec=pltpu.PrefetchScalarGridSpec(
                num_scalar_prefetch=0,
                grid=grid,
                in_specs=[
                    pl.BlockSpec((tm, d_model), lambda i, p, j: (i, 0)),   # x
                    pl.BlockSpec((d_model, tn), lambda i, p, j: (0, j)),   # W
                    pl.BlockSpec((1, tn), lambda i, p, j: (0, j)),         # b
                ],
                # p*j parks the output block at (i, 0) during the stats pass so
                # every output tile is written exactly once, consecutively.
                out_specs=pl.BlockSpec((tm, tn), lambda i, p, j: (i, p * j)),
                scratch_shapes=[pltpu.VMEM((tm, 1), jnp.float32),   # run. max
                                pltpu.VMEM((tm, 1), jnp.float32)],  # run. sum
            ),
            compiler_params=pltpu.CompilerParams(
                dimension_semantics=("parallel", "arbitrary", "arbitrary"),
                vmem_limit_bytes=vmem_limit),
            cost_estimate=pl.CostEstimate(flops=flops,
                                          transcendentals=transcendentals,
                                          bytes_accessed=bytes_accessed),
        )(x2, w, b2)

    out = out[:M, :vocab]
    return out.reshape(*orig_shape[:-1], vocab)


if __name__ == "__main__":
    key = jax.random.PRNGKey(0)

    # ---- Case 1: small ProjLayer shapes (single-pass path), f32 + bf16 ----
    d_model, vocab_size, batch, seq = 32, 128, 2, 8
    kx, kw, kb = jax.random.split(key, 3)

    # PyTorch nn.Linear(d_model, vocab): weight (vocab, d_model), bias (vocab,).
    bound = 1.0 / math.sqrt(d_model)
    w_t = jax.random.uniform(kw, (vocab_size, d_model), jnp.float32,
                             minval=-bound, maxval=bound)
    b = jax.random.uniform(kb, (vocab_size,), jnp.float32,
                           minval=-bound, maxval=bound)
    w = w_t.T  # (d_model, vocab)
    x = jax.random.normal(kx, (batch, seq, d_model), jnp.float32)

    out = jax.block_until_ready(proj_layer(x, w, b))
    ref = jax.nn.log_softmax(x @ w + b, axis=-1)
    assert out.shape == (batch, seq, vocab_size), out.shape
    assert jnp.allclose(out, ref, atol=1e-5, rtol=1e-5), "f32 single-pass mismatch"

    # bf16 MXU-operand path (recommended on v6e/v7x): looser tolerance.
    out_bf16 = jax.block_until_ready(proj_layer(x, w, b, mxu_dtype=jnp.bfloat16))
    assert jnp.allclose(out_bf16, ref, atol=2e-1, rtol=2e-1), "bf16 path diverged"

    # ---- Case 2: force the two-pass online-softmax path (multi vocab tiles,
    # non-aligned M and vocab to exercise padding/slicing) ----
    d_model2, vocab2, batch2, seq2 = 32, 640, 3, 5
    kx2, kw2, kb2 = jax.random.split(jax.random.PRNGKey(1), 3)
    bound2 = 1.0 / math.sqrt(d_model2)
    w2 = jax.random.uniform(kw2, (vocab2, d_model2), jnp.float32,
                            minval=-bound2, maxval=bound2).T
    b2 = jax.random.uniform(kb2, (vocab2,), jnp.float32,
                            minval=-bound2, maxval=bound2)
    x2 = jax.random.normal(kx2, (batch2, seq2, d_model2), jnp.float32)

    out2 = jax.block_until_ready(proj_layer(x2, w2, b2, tile_n=128))
    ref2 = jax.nn.log_softmax(x2 @ w2 + b2, axis=-1)
    assert out2.shape == (batch2, seq2, vocab2), out2.shape
    assert jnp.allclose(out2, ref2, atol=1e-5, rtol=1e-5), "f32 two-pass mismatch"

    print("KERNEL_OK")
</pallas_src>

<mosaic_0001>
module attributes {stable_mosaic.version = 11 : i64} {
  func.func @_proj_logsoftmax_single_kernel(%arg0: i32, %arg1: memref<16x32xf32, #tpu.memory_space<vmem>>, %arg2: memref<32x128xf32, #tpu.memory_space<vmem>>, %arg3: memref<1x128xf32, #tpu.memory_space<vmem>>, %arg4: memref<16x128xf32, #tpu.memory_space<vmem>>) attributes {dimension_semantics = [#tpu.dimension_semantics<parallel>], iteration_bounds = array<i64: 1>, scalar_prefetch = 0 : i64, scratch_operands = 0 : i64, tpu.core_type = #tpu.core_type<tc>, window_params = [{transform_indices = @transform_0, window_bounds = array<i64: 16, 32>}, {pipeline_mode = #tpu.pipeline_mode<synchronous>, transform_indices = @transform_1, window_bounds = array<i64: 32, 128>}, {pipeline_mode = #tpu.pipeline_mode<synchronous>, transform_indices = @transform_2, window_bounds = array<i64: 1, 128>}, {transform_indices = @transform_3, window_bounds = array<i64: 16, 128>}]} {
    %c0 = arith.constant 0 : index
    %c0_0 = arith.constant 0 : index
    %0 = vector.load %arg1[%c0, %c0_0] : memref<16x32xf32, #tpu.memory_space<vmem>>, vector<16x32xf32>
    %c0_1 = arith.constant 0 : index
    %c0_2 = arith.constant 0 : index
    %1 = vector.load %arg2[%c0_1, %c0_2] : memref<32x128xf32, #tpu.memory_space<vmem>>, vector<32x128xf32>
    %cst = arith.constant dense<0.000000e+00> : vector<16x128xf32>
    %2 = tpu.matmul %0, %1, %cst {dimension_numbers = #tpu.dot_dimension_numbers<[1], [0], [0], [1], [0, 0, 1, 1], [], []>} : vector<16x32xf32>, vector<32x128xf32>, vector<16x128xf32> -> vector<16x128xf32>
    %c0_3 = arith.constant 0 : index
    %c0_4 = arith.constant 0 : index
    %3 = vector.load %arg3[%c0_3, %c0_4] : memref<1x128xf32, #tpu.memory_space<vmem>>, vector<1x128xf32>
    %4 = vector.broadcast %3 : vector<1x128xf32> to vector<16x128xf32>
    %5 = arith.addf %2, %4 : vector<16x128xf32>
    %cst_5 = arith.constant dense<0xFF800000> : vector<16xf32>
    %6 = vector.multi_reduction <maximumf>, %5, %cst_5 [1] : vector<16x128xf32> to vector<16xf32>
    %7 = vector.shape_cast %6 : vector<16xf32> to vector<16x1xf32>
    %8 = vector.broadcast %7 : vector<16x1xf32> to vector<16x128xf32>
    %9 = arith.subf %5, %8 : vector<16x128xf32>
    %10 = math.exp %9 : vector<16x128xf32>
    %cst_6 = arith.constant dense<0.000000e+00> : vector<16xf32>
    %11 = vector.multi_reduction <add>, %10, %cst_6 [1] : vector<16x128xf32> to vector<16xf32>
    %12 = vector.shape_cast %11 : vector<16xf32> to vector<16x1xf32>
    %13 = math.log %12 : vector<16x1xf32>
    %14 = arith.addf %7, %13 : vector<16x1xf32>
    %15 = vector.broadcast %14 : vector<16x1xf32> to vector<16x128xf32>
    %16 = arith.subf %5, %15 : vector<16x128xf32>
    %c0_7 = arith.constant 0 : index
    %c0_8 = arith.constant 0 : index
    %17 = vector.load %arg4[%c0_7, %c0_8] : memref<16x128xf32, #tpu.memory_space<vmem>>, vector<16x128xf32>
    tpu.vector_store %arg4[%c0_7, %c0_8], %16 {strides = array<i32>} : memref<16x128xf32, #tpu.memory_space<vmem>>, vector<16x128xf32>,
    return
  }
  func.func @transform_0(%arg0: i32) -> (i32, i32) {
    %c0_i32 = arith.constant 0 : i32
    %c0_i32_0 = arith.constant 0 : i32
    return %arg0, %c0_i32 : i32, i32
  }
  func.func @transform_1(%arg0: i32) -> (i32, i32) {
    %c0_i32 = arith.constant 0 : i32
    %c0_i32_0 = arith.constant 0 : i32
    %c0_i32_1 = arith.constant 0 : i32
    return %c0_i32, %c0_i32_0 : i32, i32
  }
  func.func @transform_2(%arg0: i32) -> (i32, i32) {
    %c0_i32 = arith.constant 0 : i32
    %c0_i32_0 = arith.constant 0 : i32
    %c0_i32_1 = arith.constant 0 : i32
    return %c0_i32, %c0_i32_0 : i32, i32
  }
  func.func @transform_3(%arg0: i32) -> (i32, i32) {
    %c0_i32 = arith.constant 0 : i32
    %c0_i32_0 = arith.constant 0 : i32
    return %arg0, %c0_i32 : i32, i32
  }
}

</mosaic_0001>

<llo_original>
// kernel: tpu_custom_call.1
$region0: #{tpu_custom_call.1}
  #allocation0 [shape = 'u32[]', space=smem, size = 0x4, offset = 0x4, fixed_abs, tag = 'smem constant byte address 0x4 - core index']
  #allocation1 [shape = 'u32[72,128]{1,0:T(1,128)}', space=vmem, size = 0x9000, scoped, tag = 'internal scratch']
  %s0 = inlined_call_operand.hbm [shape: f32[16,32], index: 0, kind: input, shape index: {}]
  %s1 = inlined_call_operand.hbm [shape: f32[32,128], index: 1, kind: input, shape index: {}]
  %s2 = inlined_call_operand.vmem [shape: f32[1,128], index: 2, kind: input, shape index: {}]
  %s3 = inlined_call_operand.hbm [shape: f32[16,128], index: 3, kind: output, shape index: {}]
  %s4 = sld [smem:[#allocation0]]
  $region30: #{tpu_custom_call.1} parent=0
    _
  %s6 = ssub.s32 1, %s4
  %s7 = scalar_select 0, %s6, %s4
  $region1: #{tpu_custom_call.1} parent=0
    #allocation2 [shape = 'u8[8192]{0}', space=vmem, size = 0x2000, scoped, tag = 'input window, operand 0, single buffered']
    #allocation3 [shape = 's32[1]{0}', space=sflag, size = 0x4, scoped, tag = 'scoped memory for tpu_custom_call.1']
    #allocation4 [shape = 's32[1]{0}', space=sflag, size = 0x4, scoped, tag = 'scoped memory for tpu_custom_call.1']
    #allocation5 [shape = 'u8[16384]{0}', space=vmem, size = 0x4000, scoped, tag = 'input window, operand 1, single buffered']
    #allocation6 [shape = 's32[1]{0}', space=sflag, size = 0x4, scoped, tag = 'scoped memory for tpu_custom_call.1']
    #allocation7 [shape = 'u8[8192]{0}', space=vmem, size = 0x2000, scoped, tag = 'output window, operand 0, single buffered']
    %8 = vsyncpa [#allocation3], 0
    %9 = vsyncpa [#allocation6], 0
    %10 = vsyncpa [#allocation4], 0
    // Predicated region
    $region2: #{tpu_custom_call.1} parent=1 // pred_check
      _
    $region3: #{tpu_custom_call.1} parent=1 // pred_check_branch
      %12 = sbr.rel (0) target = $region5
    $region4: #{tpu_custom_call.1} parent=1 // pred_region
      %14 = vsyncadd [#allocation3], 0
      %s15 = sshll.u32 %s0, 4
      %s16 = int_to_ptr.hbm [resolvable:$true] %s15
      %s17 = sshll.u32 [#allocation2], 4
      %s18 = int_to_ptr.vmem [resolvable:$true] %s17
      %23 = dma.hbm_to_vmem [thread:$0]  %s16, 256, %s18, [#allocation3], 128, 128, 8
    $region5: #{tpu_custom_call.1} parent=1 // pred_fallthru
      _
    // Predicated region
    $region6: #{tpu_custom_call.1} parent=1 // pred_check
      _
    $region7: #{tpu_custom_call.1} parent=1 // pred_check_branch
      %25 = sbr.rel (0) target = $region9
    $region8: #{tpu_custom_call.1} parent=1 // pred_region
      %27 = vsyncadd [#allocation6], 0
      %s28 = sshll.u32 %s1, 4
      %s29 = int_to_ptr.hbm [resolvable:$true] %s28
      %s30 = sshll.u32 [#allocation5], 4
      %s31 = int_to_ptr.vmem [resolvable:$true] %s30
      %36 = dma.hbm_to_vmem [thread:$0]  %s29, 512, %s31, [#allocation6], 128, 128, 8
    $region9: #{tpu_custom_call.1} parent=1 // pred_fallthru
      _
    // Predicated region
    $region10: #{tpu_custom_call.1} parent=1 // pred_check
      _
    $region11: #{tpu_custom_call.1} parent=1 // pred_check_branch
      %38 = sbr.rel (0) target = $region13
    $region12: #{tpu_custom_call.1} parent=1 // pred_region
      _
    $region13: #{tpu_custom_call.1} parent=1 // pred_fallthru
      _
    // Predicated region
    $region14: #{tpu_custom_call.1} parent=1 // pred_check
      _
    $region15: #{tpu_custom_call.1} parent=1 // pred_check_branch
      %40 = sbr.rel (0) target = $region17
    $region16: #{tpu_custom_call.1} parent=1 // pred_region
      %42 = dma.done [#allocation3], 256
    $region17: #{tpu_custom_call.1} parent=1 // pred_fallthru
      _
    // Predicated region
    $region18: #{tpu_custom_call.1} parent=1 // pred_check
      _
    $region19: #{tpu_custom_call.1} parent=1 // pred_check_branch
      %44 = sbr.rel (0) target = $region21
    $region20: #{tpu_custom_call.1} parent=1 // pred_region
      %46 = dma.done [#allocation6], 512
    $region21: #{tpu_custom_call.1} parent=1 // pred_fallthru
      _
    %v47 = vld [vmem:[#allocation2] sm:$0xff]
    %v48 = vld [vmem:[#allocation2 + $0x8] sm:$0xff]
    %v49 = vld [vmem:[#allocation5] sm:$0xff]
    %v50 = vld [vmem:[#allocation5 + $0x8] sm:$0xff]
    %v51 = vld [vmem:[#allocation5 + $0x10] sm:$0xff]
    %v52 = vld [vmem:[#allocation5 + $0x18] sm:$0xff]
    %v53 = vld [vmem:[%s2] sm:$0x1]
    %v55 = vperm.slane %v53, 0
    %vm57 = vcmask 261120
    %v59 = vsel %vm57, %v47, 0
    %v62 = vsel %vm57, %v48, 0
    %64 = vmatpush.msra.mxu0 0.0
    %65 = vmatpush.msra.mxu0 0.0
    %66 = vmatpush.msra.mxu0 0.0
    %67 = vmatpush.msra.mxu0 0.0
    %68 = vmatpush.msra.mxu0 0.0
    %69 = vmatpush.msra.mxu0 0.0
    %70 = vmatpush.msra.mxu0 0.0
    %71 = vmatpush.msra.mxu0 0.0
    %72 = vmatpush.msra.mxu0 0.0
    %73 = vmatpush.msra.mxu0 0.0
    %74 = vmatpush.msra.mxu0 0.0
    %75 = vmatpush.msra.mxu0 0.0
    %76 = vmatpush.msra.mxu0 %v52
    %77 = vmatpush.msra.mxu0 %v51
    %78 = vmatpush.msra.mxu0 %v50
    %79 = vmatpush.msra.mxu0 %v49
    %80 = vmatmul.f32.gmra.mxu0 %v59
    %v81 = vpop.f32.mrf.mxu0
    %v82 = vadd.f32 %v55, %v81
    %83 = vmatmul.f32.gmra.mxu0 %v62
    %v84 = vpop.f32.mrf.mxu0
    %v85 = vadd.f32 %v55, %v84
    %86 = vdwg.mxu0
    %87 = vmax.xlane.f32.xlu0 %v82
    %v88 = vpop.xlane.xlu0 %87
    %89 = vmax.xlane.f32.xlu0 %v85
    %v90 = vpop.xlane.xlu0 %89
    %v91 = vsub.f32 %v82, %v88
    %v92 = vsub.f32 %v85, %v90
    %v93 = vmul.f32 %v91, 1.442695
    %v94 = vpow.pop %v93
    %v95 = vmul.f32 %v92, 1.442695
    %v96 = vpow.pop %v95
    %97 = vadd.xlane.f32.xlu0 %v94
    %v98 = vpop.xlane.xlu0 %97
    %99 = vadd.xlane.f32.xlu0 %v96
    %v100 = vpop.xlane.xlu0 %99
    %v101 = vlog2.pop %v98
    %v102 = vmul.f32 %v101, 0.6931472
    %v103 = vlog2.pop %v100
    %v104 = vmul.f32 %v103, 0.6931472
    %v105 = vadd.f32 %v88, %v102
    %v106 = vadd.f32 %v90, %v104
    %v107 = vsub.f32 %v82, %v105
    %v108 = vsub.f32 %v85, %v106
    %109 = vst [vmem:[#allocation7] sm:$0xff] %v107
    %110 = vst [vmem:[#allocation7 + $0x8] sm:$0xff] %v108
    // Predicated region
    $region22: #{tpu_custom_call.1} parent=1 // pred_check
      _
    $region23: #{tpu_custom_call.1} parent=1 // pred_check_branch
      %112 = sbr.rel (0) target = $region25
    $region24: #{tpu_custom_call.1} parent=1 // pred_region
      %114 = vsyncadd [#allocation4], 0
      %s115 = sshll.u32 [#allocation7], 4
      %s116 = int_to_ptr.vmem [resolvable:$true] %s115
      %s117 = sshll.u32 %s3, 4
      %s118 = int_to_ptr.hbm [resolvable:$true] %s117
      %123 = dma.vmem_to_hbm [thread:$0]  %s116, 256, %s118, [#allocation4], 128, 128, 8
    $region25: #{tpu_custom_call.1} parent=1 // pred_fallthru
      _
    // Predicated region
    $region26: #{tpu_custom_call.1} parent=1 // pred_check
      _
    $region27: #{tpu_custom_call.1} parent=1 // pred_check_branch
      %125 = sbr.rel (0) target = $region29
    $region28: #{tpu_custom_call.1} parent=1 // pred_region
      %127 = dma.done [#allocation4], 256
    $region29: #{tpu_custom_call.1} parent=1 // pred_fallthru
      _
    %128 = vsyncpa [#allocation3], 1
    %129 = vsyncpa [#allocation6], 1
    %130 = vsyncpa [#allocation4], 1

</llo_original>
